<compile_context>
chip_gen: v7x
topology: tpu7x:2x2x1
jax: 0.10.0
libtpu: 0.0.40
codegen_flags: <defaults>
</compile_context>

<pallas_src>
import functools
import math

import jax
import jax.numpy as jnp
import numpy as np
from jax.experimental import pallas as pl
from jax.experimental.pallas import tpu as pltpu


def _make_pool_kernel(n_mm, cin_chunk, cout_chunk):
    """n_mm small matmuls against one shared (cin_chunk, cout_chunk) matrix."""

    def kernel(x_ref, m_ref, o_ref):
        # NOTE: the last grid block may be partial.  The MXU then consumes a
        # few out-of-range input rows, but Pallas masks those output rows on
        # the HBM writeback, so they are never observed.  Keep it that way.
        m = m_ref[...]
        for g in range(n_mm):  # static unroll, n_mm <= 32
            xs = x_ref[:, g * cin_chunk:(g + 1) * cin_chunk]
            acc = jnp.dot(xs, m, preferred_element_type=jnp.float32)
            o_ref[:, g * cout_chunk:(g + 1) * cout_chunk] = acc.astype(o_ref.dtype)

    return kernel


@functools.lru_cache(maxsize=None)
def _pool_matrix(W, Wo, kc, dtype_name):
    """(kc*2W, kc*Wo) block-diagonal 2x2-mean matrix, cached per shape/dtype.

    Built once on the host (numpy) so repeated calls reuse the same device
    constant instead of re-materializing a broadcast-compare every call.
    For odd W the last input column has no entries -> implicit floor/crop.
    """
    m = np.zeros((kc * 2 * W, kc * Wo), dtype=np.float32)
    for g in range(kc):
        base = g * 2 * W
        for j in range(Wo):
            col = g * Wo + j
            for off in (2 * j, 2 * j + 1, W + 2 * j, W + 2 * j + 1):
                m[base + off, col] = 0.25
    return jnp.asarray(m, dtype=dtype_name)


def _choose_kc(k, W):
    """Groups per matmul chunk.

    Keep arithmetic intensity ~kc*W/5 f32 FLOPs per HBM byte low enough that
    the kernel stays HBM-bound on every chip (including v5e's decomposed-f32
    MXU), while bounding the statically unrolled matmul count to <= 32.
    """
    divisors = [d for d in range(1, k + 1) if k % d == 0]
    ok = [d for d in divisors if d * W <= 128]
    kc = max(ok) if ok else 1
    for d in divisors:  # ascending: smallest divisor >= kc with unroll <= 32
        if d >= kc and k // d <= 32:
            return d
    return k


def avg_pool_2x2(x, *, target_tile_bytes=None):
    """nn.AvgPool2d(kernel_size=(2, 2), stride=2) on NCHW input."""
    if not jnp.issubdtype(x.dtype, jnp.floating):
        raise TypeError(
            "avg_pool_2x2 requires a floating-point input dtype, got "
            f"{x.dtype}: integer dtypes would silently truncate the 0.25 "
            "pooling weights.")
    N, C, H, W = x.shape
    Ho, Wo = H // 2, W // 2
    if Ho == 0 or Wo == 0:
        raise ValueError("spatial dims must be >= 2 for 2x2/stride-2 pooling")

    if H % 2:
        # TODO(synk): odd H still crops wrapper-side (one extra copy); odd W
        # is handled for free inside the pooling matrix.
        x = x[:, :, : 2 * Ho, :]

    itemsize = jnp.dtype(x.dtype).itemsize
    dtype_name = jnp.dtype(x.dtype).name

    # ---- row packing so the output block lane width is a multiple of 128 ----
    R = N * C * Ho  # one packed row pair per 2x2 output row
    k = 128 // math.gcd(Wo, 128)  # k*Wo = lcm(Wo, 128)
    if Wo % 128 == 0 or Wo >= 96 or k * 2 * W > 8192:
        k = 1  # already (nearly) lane-dense, or packing would cost too much
    R_pad = ((R + k - 1) // k) * k
    Rg = R_pad // k
    Cin = k * 2 * W
    Cout = k * Wo

    x_rows = x.reshape(R, 2 * W)  # pure adjacent-dim merge
    if R_pad != R:
        x_rows = jnp.pad(x_rows, ((0, R_pad - R), (0, 0)))
    x_packed = x_rows.reshape(Rg, Cin)

    # ---- block-diagonal matmul chunking (one tiny shared matrix) ------------
    kc = _choose_kc(k, W)
    n_mm = k // kc
    cin_chunk = kc * 2 * W
    cout_chunk = kc * Wo
    pool_m = _pool_matrix(W, Wo, kc, dtype_name)

    # ---- tile sizing: dtype-aware granule, >=4 grid steps, VMEM budget ------
    granule = {1: 32, 2: 16}.get(itemsize, 8)
    try:
        vmem_cap = pltpu.get_tpu_info().vmem_capacity_bytes
    except Exception:  # be conservative if the query is unavailable
        vmem_cap = 64 * 1024 * 1024
    big_vmem = vmem_cap >= 100 * 1024 * 1024  # v5e/v6e: 128 MiB; v7x: 64 MiB
    if target_tile_bytes is None:
        target_tile_bytes = (8 if big_vmem else 4) * 1024 * 1024
    vmem_limit = (64 if big_vmem else 32) * 1024 * 1024
    vmem_budget = vmem_limit - 8 * 1024 * 1024  # headroom

    rows_target = max(1, target_tile_bytes // (Cin * itemsize))
    tile_r = max(granule, (rows_target // granule) * granule)

    # Never collapse to a single grid step on non-tiny inputs: >= 4 steps so
    # the DMA/compute pipeline overlaps and both v7x TensorCores get work.
    min_steps = 4
    cap = (pl.cdiv(Rg, min_steps) // granule) * granule
    if cap >= granule:
        tile_r = min(tile_r, cap)
    if tile_r >= Rg:
        tile_r = Rg  # full-extent block (always legal)

    def _vmem_bytes(tr):
        return (2 * tr * (Cin + Cout) * itemsize          # double-buffered in/out
                + tr * Cout * 4                           # f32 accumulator temps
                + 2 * cin_chunk * cout_chunk * itemsize)  # pooling matrix (x2 buf)

    while tile_r > granule and _vmem_bytes(tile_r) > vmem_budget:
        tile_r = max(granule, ((tile_r // 2) // granule) * granule)

    grid = (pl.cdiv(Rg, tile_r),)

    out_packed = pl.pallas_call(
        _make_pool_kernel(n_mm, cin_chunk, cout_chunk),
        out_shape=jax.ShapeDtypeStruct((Rg, Cout), x.dtype),
        grid_spec=pltpu.PrefetchScalarGridSpec(
            num_scalar_prefetch=0,
            grid=grid,
            in_specs=[
                pl.BlockSpec((tile_r, Cin), lambda r: (r, 0)),
                # Constant block index -> fetched once by the pipeline.  The
                # chunked matrix is <= ~100 KiB, so even its default double
                # buffer is a non-issue under v7x's 64 MiB VMEM.
                pl.BlockSpec((cin_chunk, cout_chunk), lambda r: (0, 0)),
            ],
            out_specs=pl.BlockSpec((tile_r, Cout), lambda r: (r, 0)),
        ),
        compiler_params=pltpu.CompilerParams(
            dimension_semantics=("parallel",),
            vmem_limit_bytes=vmem_limit,
        ),
    )(x_packed, pool_m)

    out = out_packed.reshape(R_pad, Wo)
    if R_pad != R:
        out = out[:R]
    return out.reshape(N, C, Ho, Wo)


if __name__ == "__main__":
    def _ref_pool(x):
        n, c, h, w = x.shape
        ho, wo = h // 2, w // 2
        xc = x[:, :, : 2 * ho, : 2 * wo].astype(jnp.float32)
        return xc.reshape(n, c, ho, 2, wo, 2).mean(axis=(3, 5))

    # 1) Shape implied by the module forward (NCHW), small.
    x1 = jax.random.normal(jax.random.PRNGKey(0), (2, 4, 16, 16), jnp.float32)
    o1 = jax.block_until_ready(avg_pool_2x2(x1))
    assert o1.shape == (2, 4, 8, 8)
    assert jnp.allclose(o1, _ref_pool(x1), atol=1e-5, rtol=1e-5)

    # 2) Larger case exercising the multi-step ("parallel") grid and the
    #    chunked (n_mm > 1) matmul path.
    x2 = jax.random.normal(jax.random.PRNGKey(1), (2, 8, 64, 64), jnp.float32)
    o2 = jax.block_until_ready(avg_pool_2x2(x2))
    assert jnp.allclose(o2, _ref_pool(x2), atol=1e-5, rtol=1e-5)

    # 3) Odd spatial dims: odd W handled inside the pooling matrix, odd H
    #    cropped -> PyTorch floor behaviour; also exercises row padding (R%k).
    x3 = jax.random.normal(jax.random.PRNGKey(2), (2, 4, 17, 15), jnp.float32)
    o3 = jax.block_until_ready(avg_pool_2x2(x3))
    assert o3.shape == (2, 4, 8, 7)
    assert jnp.allclose(o3, _ref_pool(x3), atol=1e-5, rtol=1e-5)

    # 4) bf16 path (16-row sublane granule, f32 accumulation, cast on store).
    x4 = jax.random.normal(jax.random.PRNGKey(3), (2, 4, 32, 32)).astype(jnp.bfloat16)
    o4 = jax.block_until_ready(avg_pool_2x2(x4))
    assert jnp.allclose(o4.astype(jnp.float32), _ref_pool(x4), atol=1e-2, rtol=1e-2)

    print("KERNEL_OK")
</pallas_src>

<mosaic_0001>
module attributes {stable_mosaic.version = 11 : i64} {
  func.func @kernel(%arg0: i32, %arg1: memref<4x512xf32, #tpu.memory_space<vmem>>, %arg2: memref<256x64xf32, #tpu.memory_space<vmem>>, %arg3: memref<4x128xf32, #tpu.memory_space<vmem>>) attributes {dimension_semantics = [#tpu.dimension_semantics<parallel>], iteration_bounds = array<i64: 1>, scalar_prefetch = 0 : i64, scratch_operands = 0 : i64, tpu.core_type = #tpu.core_type<tc>, window_params = [{transform_indices = @transform_0, window_bounds = array<i64: 4, 512>}, {pipeline_mode = #tpu.pipeline_mode<synchronous>, transform_indices = @transform_1, window_bounds = array<i64: 256, 64>}, {transform_indices = @transform_2, window_bounds = array<i64: 4, 128>}]} {
    %c0 = arith.constant 0 : index
    %c0_0 = arith.constant 0 : index
    %0 = vector.load %arg2[%c0, %c0_0] : memref<256x64xf32, #tpu.memory_space<vmem>>, vector<256x64xf32>
    %c0_1 = arith.constant 0 : index
    %c0_2 = arith.constant 0 : index
    %1 = vector.load %arg1[%c0_1, %c0_2] : memref<4x512xf32, #tpu.memory_space<vmem>>, vector<4x256xf32>
    %cst = arith.constant dense<0.000000e+00> : vector<4x64xf32>
    %2 = tpu.matmul %1, %0, %cst {dimension_numbers = #tpu.dot_dimension_numbers<[1], [0], [0], [1], [0, 0, 1, 1], [], []>} : vector<4x256xf32>, vector<256x64xf32>, vector<4x64xf32> -> vector<4x64xf32>
    %c0_3 = arith.constant 0 : index
    %c0_4 = arith.constant 0 : index
    %3 = vector.load %arg3[%c0_3, %c0_4] : memref<4x128xf32, #tpu.memory_space<vmem>>, vector<4x64xf32>
    tpu.vector_store %arg3[%c0_3, %c0_4], %2 {strides = array<i32>} : memref<4x128xf32, #tpu.memory_space<vmem>>, vector<4x64xf32>,
    %c0_5 = arith.constant 0 : index
    %c256 = arith.constant 256 : index
    %4 = vector.load %arg1[%c0_5, %c256] : memref<4x512xf32, #tpu.memory_space<vmem>>, vector<4x256xf32>
    %cst_6 = arith.constant dense<0.000000e+00> : vector<4x64xf32>
    %5 = tpu.matmul %4, %0, %cst_6 {dimension_numbers = #tpu.dot_dimension_numbers<[1], [0], [0], [1], [0, 0, 1, 1], [], []>} : vector<4x256xf32>, vector<256x64xf32>, vector<4x64xf32> -> vector<4x64xf32>
    %c0_7 = arith.constant 0 : index
    %c64 = arith.constant 64 : index
    %6 = vector.load %arg3[%c0_7, %c64] : memref<4x128xf32, #tpu.memory_space<vmem>>, vector<4x64xf32>
    tpu.vector_store %arg3[%c0_7, %c64], %5 {strides = array<i32>} : memref<4x128xf32, #tpu.memory_space<vmem>>, vector<4x64xf32>,
    return
  }
  func.func @transform_0(%arg0: i32) -> (i32, i32) {
    %c0_i32 = arith.constant 0 : i32
    %c0_i32_0 = arith.constant 0 : i32
    return %arg0, %c0_i32 : i32, i32
  }
  func.func @transform_1(%arg0: i32) -> (i32, i32) {
    %c0_i32 = arith.constant 0 : i32
    %c0_i32_0 = arith.constant 0 : i32
    %c0_i32_1 = arith.constant 0 : i32
    return %c0_i32, %c0_i32_0 : i32, i32
  }
  func.func @transform_2(%arg0: i32) -> (i32, i32) {
    %c0_i32 = arith.constant 0 : i32
    %c0_i32_0 = arith.constant 0 : i32
    return %arg0, %c0_i32 : i32, i32
  }
}

</mosaic_0001>

<llo_original>
// kernel: tpu_custom_call.1
$region0: #{tpu_custom_call.1}
  #allocation0 [shape = 'u32[]', space=smem, size = 0x4, offset = 0x4, fixed_abs, tag = 'smem constant byte address 0x4 - core index']
  #allocation1 [shape = 'u32[144,128]{1,0:T(1,128)}', space=vmem, size = 0x12000, scoped, tag = 'internal scratch']
  %s0 = inlined_call_operand.vmem [shape: f32[4,512], index: 0, kind: input, shape index: {}]
  %s1 = inlined_call_operand.vmem [shape: f32[256,64], index: 1, kind: input, shape index: {}]
  %s2 = inlined_call_operand.hbm [shape: f32[4,128], index: 2, kind: output, shape index: {}]
  %s3 = sld [smem:[#allocation0]]
  $region18: #{tpu_custom_call.1} parent=0
    _
  %s5 = ssub.s32 1, %s3
  %s6 = scalar_select 0, %s5, %s3
  $region1: #{tpu_custom_call.1} parent=0
    #allocation2 [shape = 'u8[2048]{0}', space=vmem, size = 0x800, scoped, tag = 'output window, operand 0, single buffered']
    #allocation3 [shape = 's32[1]{0}', space=sflag, size = 0x4, scoped, tag = 'scoped memory for tpu_custom_call.1']
    %7 = vsyncpa [#allocation3], 0
    // Predicated region
    $region2: #{tpu_custom_call.1} parent=1 // pred_check
      _
    $region3: #{tpu_custom_call.1} parent=1 // pred_check_branch
      %9 = sbr.rel (0) target = $region5
    $region4: #{tpu_custom_call.1} parent=1 // pred_region
      _
    $region5: #{tpu_custom_call.1} parent=1 // pred_fallthru
      _
    // Predicated region
    $region6: #{tpu_custom_call.1} parent=1 // pred_check
      _
    $region7: #{tpu_custom_call.1} parent=1 // pred_check_branch
      %11 = sbr.rel (0) target = $region9
    $region8: #{tpu_custom_call.1} parent=1 // pred_region
      _
    $region9: #{tpu_custom_call.1} parent=1 // pred_fallthru
      _
    %v12 = vld [vmem:[%s1] sm:$0xff]
    %v13 = vld [vmem:[%s1 + $0x8] sm:$0xff]
    %v14 = vld [vmem:[%s1 + $0x10] sm:$0xff]
    %v15 = vld [vmem:[%s1 + $0x18] sm:$0xff]
    %v16 = vld [vmem:[%s1 + $0x20] sm:$0xff]
    %v17 = vld [vmem:[%s1 + $0x28] sm:$0xff]
    %v18 = vld [vmem:[%s1 + $0x30] sm:$0xff]
    %v19 = vld [vmem:[%s1 + $0x38] sm:$0xff]
    %v20 = vld [vmem:[%s1 + $0x40] sm:$0xff]
    %v21 = vld [vmem:[%s1 + $0x48] sm:$0xff]
    %v22 = vld [vmem:[%s1 + $0x50] sm:$0xff]
    %v23 = vld [vmem:[%s1 + $0x58] sm:$0xff]
    %v24 = vld [vmem:[%s1 + $0x60] sm:$0xff]
    %v25 = vld [vmem:[%s1 + $0x68] sm:$0xff]
    %v26 = vld [vmem:[%s1 + $0x70] sm:$0xff]
    %v27 = vld [vmem:[%s1 + $0x78] sm:$0xff]
    %v28 = vld [vmem:[%s1 + $0x80] sm:$0xff]
    %v29 = vld [vmem:[%s1 + $0x88] sm:$0xff]
    %v30 = vld [vmem:[%s1 + $0x90] sm:$0xff]
    %v31 = vld [vmem:[%s1 + $0x98] sm:$0xff]
    %v32 = vld [vmem:[%s1 + $0xa0] sm:$0xff]
    %v33 = vld [vmem:[%s1 + $0xa8] sm:$0xff]
    %v34 = vld [vmem:[%s1 + $0xb0] sm:$0xff]
    %v35 = vld [vmem:[%s1 + $0xb8] sm:$0xff]
    %v36 = vld [vmem:[%s1 + $0xc0] sm:$0xff]
    %v37 = vld [vmem:[%s1 + $0xc8] sm:$0xff]
    %v38 = vld [vmem:[%s1 + $0xd0] sm:$0xff]
    %v39 = vld [vmem:[%s1 + $0xd8] sm:$0xff]
    %v40 = vld [vmem:[%s1 + $0xe0] sm:$0xff]
    %v41 = vld [vmem:[%s1 + $0xe8] sm:$0xff]
    %v42 = vld [vmem:[%s1 + $0xf0] sm:$0xff]
    %v43 = vld [vmem:[%s1 + $0xf8] sm:$0xff]
    %v44 = vld [vmem:[%s0] sm:$0xff]
    %v46 = vcombine.high %v44, %v44
    %48 = vmatprep.subr.mxu0 0.0
    %49 = vmatpush1.msra.mxu0 %v12
    %50 = vmatprep.subr.mxu0 0.0
    %51 = vmatpush1.msra.mxu0 %v13
    %52 = vmatprep.subr.mxu0 0.0
    %53 = vmatpush1.msra.mxu0 %v14
    %54 = vmatprep.subr.mxu0 0.0
    %55 = vmatpush1.msra.mxu0 %v15
    %56 = vmatprep.subr.mxu0 0.0
    %57 = vmatpush1.msra.mxu0 %v16
    %58 = vmatprep.subr.mxu0 0.0
    %59 = vmatpush1.msra.mxu0 %v17
    %60 = vmatprep.subr.mxu0 0.0
    %61 = vmatpush1.msra.mxu0 %v18
    %62 = vmatprep.subr.mxu0 0.0
    %63 = vmatpush1.msra.mxu0 %v19
    %64 = vmatprep.subr.mxu0 0.0
    %65 = vmatpush1.msra.mxu0 %v20
    %66 = vmatprep.subr.mxu0 0.0
    %67 = vmatpush1.msra.mxu0 %v21
    %68 = vmatprep.subr.mxu0 0.0
    %69 = vmatpush1.msra.mxu0 %v22
    %70 = vmatprep.subr.mxu0 0.0
    %71 = vmatpush1.msra.mxu0 %v23
    %72 = vmatprep.subr.mxu0 0.0
    %73 = vmatpush1.msra.mxu0 %v24
    %74 = vmatprep.subr.mxu0 0.0
    %75 = vmatpush1.msra.mxu0 %v25
    %76 = vmatprep.subr.mxu0 0.0
    %77 = vmatpush1.msra.mxu0 %v26
    %78 = vmatprep.subr.mxu0 0.0
    %79 = vmatpush1.msra.mxu0 %v27
    %80 = vmatprep.subr.mxu0 0.0
    %81 = vmatpush1.msra.mxu0 %v28
    %82 = vmatprep.subr.mxu0 0.0
    %83 = vmatpush1.msra.mxu0 %v29
    %84 = vmatprep.subr.mxu0 0.0
    %85 = vmatpush1.msra.mxu0 %v30
    %86 = vmatprep.subr.mxu0 0.0
    %87 = vmatpush1.msra.mxu0 %v31
    %88 = vmatprep.subr.mxu0 0.0
    %89 = vmatpush1.msra.mxu0 %v32
    %90 = vmatprep.subr.mxu0 0.0
    %91 = vmatpush1.msra.mxu0 %v33
    %92 = vmatprep.subr.mxu0 0.0
    %93 = vmatpush1.msra.mxu0 %v34
    %94 = vmatprep.subr.mxu0 0.0
    %95 = vmatpush1.msra.mxu0 %v35
    %96 = vmatprep.subr.mxu0 0.0
    %97 = vmatpush1.msra.mxu0 %v36
    %98 = vmatprep.subr.mxu0 0.0
    %99 = vmatpush1.msra.mxu0 %v37
    %100 = vmatprep.subr.mxu0 0.0
    %101 = vmatpush1.msra.mxu0 %v38
    %102 = vmatprep.subr.mxu0 0.0
    %103 = vmatpush1.msra.mxu0 %v39
    %104 = vmatprep.subr.mxu0 0.0
    %105 = vmatpush1.msra.mxu0 %v40
    %106 = vmatprep.subr.mxu0 0.0
    %107 = vmatpush1.msra.mxu0 %v41
    %108 = vmatprep.subr.mxu0 0.0
    %109 = vmatpush1.msra.mxu0 %v42
    %110 = vmatprep.subr.mxu0 0.0
    %111 = vmatpush1.msra.mxu0 %v43
    %112 = vmatprep.mubr.f32.mxu0 %v46
    %113 = vmatmul.mubr.f32.gmra.mrb[0].mxu0 %v44
    %v114 = vpop.f32.mrb[0].mxu0
    %v115 = vadd.f32 0.0, %v114
    %v116 = vpop.f32.mrb[0].mxu0
    %117 = vdwg.mxu0
    %vm118 = vcmask 519168
    %119 = vst.msk [vmem:[#allocation2] sm:$0xf] %vm118, %v115
    %v120 = vld [vmem:[%s0 + $0x8] sm:$0xff]
    %v122 = vcombine.high %v120, %v120
    %124 = vmatprep.subr.mxu0 0.0
    %125 = vmatpush1.msra.mxu0 %v12
    %126 = vmatprep.subr.mxu0 0.0
    %127 = vmatpush1.msra.mxu0 %v13
    %128 = vmatprep.subr.mxu0 0.0
    %129 = vmatpush1.msra.mxu0 %v14
    %130 = vmatprep.subr.mxu0 0.0
    %131 = vmatpush1.msra.mxu0 %v15
    %132 = vmatprep.subr.mxu0 0.0
    %133 = vmatpush1.msra.mxu0 %v16
    %134 = vmatprep.subr.mxu0 0.0
    %135 = vmatpush1.msra.mxu0 %v17
    %136 = vmatprep.subr.mxu0 0.0
    %137 = vmatpush1.msra.mxu0 %v18
    %138 = vmatprep.subr.mxu0 0.0
    %139 = vmatpush1.msra.mxu0 %v19
    %140 = vmatprep.subr.mxu0 0.0
    %141 = vmatpush1.msra.mxu0 %v20
    %142 = vmatprep.subr.mxu0 0.0
    %143 = vmatpush1.msra.mxu0 %v21
    %144 = vmatprep.subr.mxu0 0.0
    %145 = vmatpush1.msra.mxu0 %v22
    %146 = vmatprep.subr.mxu0 0.0
    %147 = vmatpush1.msra.mxu0 %v23
    %148 = vmatprep.subr.mxu0 0.0
    %149 = vmatpush1.msra.mxu0 %v24
    %150 = vmatprep.subr.mxu0 0.0
    %151 = vmatpush1.msra.mxu0 %v25
    %152 = vmatprep.subr.mxu0 0.0
    %153 = vmatpush1.msra.mxu0 %v26
    %154 = vmatprep.subr.mxu0 0.0
    %155 = vmatpush1.msra.mxu0 %v27
    %156 = vmatprep.subr.mxu0 0.0
    %157 = vmatpush1.msra.mxu0 %v28
    %158 = vmatprep.subr.mxu0 0.0
    %159 = vmatpush1.msra.mxu0 %v29
    %160 = vmatprep.subr.mxu0 0.0
    %161 = vmatpush1.msra.mxu0 %v30
    %162 = vmatprep.subr.mxu0 0.0
    %163 = vmatpush1.msra.mxu0 %v31
    %164 = vmatprep.subr.mxu0 0.0
    %165 = vmatpush1.msra.mxu0 %v32
    %166 = vmatprep.subr.mxu0 0.0
    %167 = vmatpush1.msra.mxu0 %v33
    %168 = vmatprep.subr.mxu0 0.0
    %169 = vmatpush1.msra.mxu0 %v34
    %170 = vmatprep.subr.mxu0 0.0
    %171 = vmatpush1.msra.mxu0 %v35
    %172 = vmatprep.subr.mxu0 0.0
    %173 = vmatpush1.msra.mxu0 %v36
    %174 = vmatprep.subr.mxu0 0.0
    %175 = vmatpush1.msra.mxu0 %v37
    %176 = vmatprep.subr.mxu0 0.0
    %177 = vmatpush1.msra.mxu0 %v38
    %178 = vmatprep.subr.mxu0 0.0
    %179 = vmatpush1.msra.mxu0 %v39
    %180 = vmatprep.subr.mxu0 0.0
    %181 = vmatpush1.msra.mxu0 %v40
    %182 = vmatprep.subr.mxu0 0.0
    %183 = vmatpush1.msra.mxu0 %v41
    %184 = vmatprep.subr.mxu0 0.0
    %185 = vmatpush1.msra.mxu0 %v42
    %186 = vmatprep.subr.mxu0 0.0
    %187 = vmatpush1.msra.mxu0 %v43
    %188 = vmatprep.mubr.f32.mxu0 %v122
    %189 = vmatmul.mubr.f32.gmra.mrb[0].mxu0 %v120
    %v190 = vpop.f32.mrb[0].mxu0
    %v191 = vadd.f32 0.0, %v190
    %v192 = vpop.f32.mrb[0].mxu0
    %193 = vdwg.mxu0
    %195 = vrot.lane.b32.xlu0 %v191, 64
    %v196 = vpop.permute.xlu0 %195
    %vm198 = vcmask 1043968
    %199 = vst.msk [vmem:[#allocation2] sm:$0xf] %vm198, %v196
    // Predicated region
    $region10: #{tpu_custom_call.1} parent=1 // pred_check
      _
    $region11: #{tpu_custom_call.1} parent=1 // pred_check_branch
      %201 = sbr.rel (0) target = $region13
    $region12: #{tpu_custom_call.1} parent=1 // pred_region
      %s203 = ssub.s32 64, 64
      %204 = vsyncadd [#allocation3], %s203
      %s206 = sshll.u32 [#allocation2], 4
      %s207 = int_to_ptr.vmem [resolvable:$true] %s206
      %209 = dma.vmem_to_hbm [thread:$0]  %s207, 64, %s2, [#allocation3]
    $region13: #{tpu_custom_call.1} parent=1 // pred_fallthru
      _
    // Predicated region
    $region14: #{tpu_custom_call.1} parent=1 // pred_check
      _
    $region15: #{tpu_custom_call.1} parent=1 // pred_check_branch
      %211 = sbr.rel (0) target = $region17
    $region16: #{tpu_custom_call.1} parent=1 // pred_region
      %212 = dma.done [#allocation3], 64
    $region17: #{tpu_custom_call.1} parent=1 // pred_fallthru
      _
    %213 = vsyncpa [#allocation3], 1

</llo_original>
